<compile_context>
chip_gen: v7x
topology: tpu7x:2x2x1
jax: 0.10.0
libtpu: 0.0.40
codegen_flags: <defaults>
</compile_context>

<pallas_src>
import jax
import jax.numpy as jnp
from jax.experimental import pallas as pl
from jax.experimental.pallas import tpu as pltpu

_LANES = 128
_TM_MAX = 4096  # rows per tile: 4096*128*4B = 2 MiB per f32 input buffer


def _round_up(n: int, m: int) -> int:
    return ((n + m - 1) // m) * m


def _num_tensorcores() -> int:
    """Best-effort TensorCore-per-device count (correctness does not depend on it)."""
    try:
        kind = jax.devices()[0].device_kind.lower()
    except Exception:  # pragma: no cover
        return 1
    for tag in ("v4", "v5p", "v7"):  # megacore / dual-TC generations
        if tag in kind:
            return 2
    return 1


def _youdens_index_impl(logits: jax.Array, targets: jax.Array) -> jax.Array:
    """Youden's index over the full tensors (returns a float32 scalar)."""
    assert logits.shape == targets.shape
    total = int(logits.size)

    rows = pl.cdiv(total, _LANES)               # 128-lane rows covering the data
    tm = min(_TM_MAX, _round_up(rows, 8))       # rows per tile (multiple of 8)
    nblocks = pl.cdiv(rows, tm)                 # row blocks (last one may be partial)

    ncores = _num_tensorcores()
    nsplit = ncores if (ncores > 1 and nblocks >= 2 * ncores) else 1
    inner = pl.cdiv(nblocks, nsplit)
    phantom = nsplit * inner != nblocks         # grid has one duplicate (skipped) step
    tail = nblocks * tm * _LANES != total       # last block has padding / over-read
    last_blk = nblocks - 1

    def _prep(a):
        flat = a.reshape(-1)
        if total % _LANES != 0:
            # Only the ragged case pays a pad (to the next multiple of 128).
            flat = jnp.pad(flat, (0, rows * _LANES - total))
        return flat.reshape(rows, _LANES)       # native dtype through the DMA

    lx = _prep(logits)
    tx = _prep(targets)

    def kernel(x_ref, t_ref, acc_ref):
        c = pl.program_id(0)
        j = pl.program_id(1)
        blk = c * inner + j                     # logical row-block id

        @pl.when(j == 0)
        def _init():
            acc_ref[...] = jnp.zeros_like(acc_ref)

        def accumulate(apply_mask: bool):
            x = x_ref[...].astype(jnp.float32)  # (tm, 128)
            t = t_ref[...].astype(jnp.float32)
            one_m_t = 1.0 - t
            # (v > 0.5) == round(clip(v, 0, 1)) for all finite v.
            tp_e = (x * t > 0.5).astype(jnp.float32)
            pp_e = (t > 0.5).astype(jnp.float32)
            tn_e = ((1.0 - x) * one_m_t > 0.5).astype(jnp.float32)
            pn_e = (one_m_t > 0.5).astype(jnp.float32)
            if apply_mask:
                # Zero out padded / over-read elements (they would otherwise
                # count as true negatives / possible negatives).  jnp.where so
                # uninitialized VMEM (NaN/Inf) cannot poison the accumulator.
                base = blk * (tm * _LANES)
                row_ids = jax.lax.broadcasted_iota(jnp.int32, (tm, _LANES), 0)
                lane_ids = jax.lax.broadcasted_iota(jnp.int32, (tm, _LANES), 1)
                valid = (base + row_ids * _LANES + lane_ids) < total
                tp_e = jnp.where(valid, tp_e, 0.0)
                pp_e = jnp.where(valid, pp_e, 0.0)
                tn_e = jnp.where(valid, tn_e, 0.0)
                pn_e = jnp.where(valid, pn_e, 0.0)
            # Lane-resident partial sums: only a sublane-axis reduce per step.
            partial = jnp.concatenate(
                [
                    jnp.sum(tp_e, axis=0, keepdims=True),
                    jnp.sum(pp_e, axis=0, keepdims=True),
                    jnp.sum(tn_e, axis=0, keepdims=True),
                    jnp.sum(pn_e, axis=0, keepdims=True),
                ],
                axis=0,
            )  # (4, 128)
            acc_ref[0] += partial

        def body():
            if tail:
                @pl.when(blk == last_blk)
                def _tail():
                    accumulate(True)

                @pl.when(blk != last_blk)
                def _bulk():
                    accumulate(False)
            else:
                accumulate(False)

        if phantom:
            # Uneven core split: the very last grid step maps past the data.
            @pl.when(blk <= last_blk)
            def _guarded():
                body()
        else:
            body()

    def in_idx(c, j):
        b = c * inner + j
        if phantom:
            b = jnp.minimum(b, last_blk)        # keep the DMA in bounds
        return (b, 0)

    out = pl.pallas_call(
        kernel,
        out_shape=jax.ShapeDtypeStruct((nsplit, 4, _LANES), jnp.float32),
        grid_spec=pltpu.PrefetchScalarGridSpec(
            num_scalar_prefetch=0,
            grid=(nsplit, inner),
            in_specs=[
                pl.BlockSpec((tm, _LANES), in_idx),
                pl.BlockSpec((tm, _LANES), in_idx),
            ],
            out_specs=pl.BlockSpec((1, 4, _LANES), lambda c, j: (c, 0, 0)),
        ),
        compiler_params=pltpu.CompilerParams(
            # axis 0: independent row ranges (2-TC split on dual-core chips),
            # axis 1: carried accumulator -> arbitrary.
            dimension_semantics=("parallel", "arbitrary"),
        ),
    )(lx, tx)

    # Tiny epilogue (fused under jit): combine per-core / per-lane partials
    # and finish the formula.
    tp = jnp.sum(out[:, 0, :])
    pp = jnp.sum(out[:, 1, :])
    tn = jnp.sum(out[:, 2, :])
    pn = jnp.sum(out[:, 3, :])
    sensitivity = tp / (pp + 1e-7)
    specificity = tn / (pn + 1e-7)
    return specificity + sensitivity - 1.0


# jit the wrapper so the reshape / epilogue fuse into one dispatch around the kernel.
youdens_index = jax.jit(_youdens_index_impl)


def _reference(logits, targets):
    tp = jnp.sum(jnp.round(jnp.clip(logits * targets, 0, 1)))
    pp = jnp.sum(jnp.round(jnp.clip(targets, 0, 1)))
    tn = jnp.sum(jnp.round(jnp.clip((1 - logits) * (1 - targets), 0, 1)))
    pn = jnp.sum(jnp.round(jnp.clip(1 - targets, 0, 1)))
    return tn / (pn + 1e-7) + tp / (pp + 1e-7) - 1.0


if __name__ == "__main__":
    key = jax.random.PRNGKey(0)
    k1, k2, k3, k4 = jax.random.split(key, 4)

    # Small NCHW-like shapes: batch=2, channels=4, spatial=16x16.
    shape = (2, 4, 16, 16)
    logits = jax.nn.sigmoid(jax.random.normal(k1, shape, dtype=jnp.float32))
    targets = (jax.random.uniform(k2, shape) > 0.8).astype(jnp.float32)  # imbalanced

    result = jax.block_until_ready(youdens_index(logits, targets))
    ref = _reference(logits, targets)
    assert jnp.allclose(result, ref, atol=1e-5), (result, ref)

    # Second check: ragged size (not a multiple of 128) exercises the
    # partial-block + in-kernel mask path.
    shape2 = (3, 5, 7, 11)
    logits2 = jax.nn.sigmoid(jax.random.normal(k3, shape2, dtype=jnp.float32))
    targets2 = (jax.random.uniform(k4, shape2) > 0.7).astype(jnp.float32)
    result2 = jax.block_until_ready(youdens_index(logits2, targets2))
    ref2 = _reference(logits2, targets2)
    assert jnp.allclose(result2, ref2, atol=1e-5), (result2, ref2)

    print("KERNEL_OK")
</pallas_src>

<mosaic_0001>
module attributes {stable_mosaic.version = 11 : i64} {
  func.func @kernel(%arg0: i32, %arg1: i32, %arg2: memref<16x128xf32, #tpu.memory_space<vmem>>, %arg3: memref<16x128xf32, #tpu.memory_space<vmem>>, %arg4: memref<1x4x128xf32, #tpu.memory_space<vmem>>) attributes {dimension_semantics = [#tpu.dimension_semantics<parallel>, #tpu.dimension_semantics<arbitrary>], iteration_bounds = array<i64: 1, 1>, scalar_prefetch = 0 : i64, scratch_operands = 0 : i64, tpu.core_type = #tpu.core_type<tc>, window_params = [{transform_indices = @transform_0, window_bounds = array<i64: 16, 128>}, {transform_indices = @transform_1, window_bounds = array<i64: 16, 128>}, {transform_indices = @transform_2, window_bounds = array<i64: 1, 4, 128>}]} {
    %c0_i32 = arith.constant 0 : i32
    %0 = arith.cmpi eq, %arg1, %c0_i32 : i32
    %1 = arith.extui %0 : i1 to i32
    %c0_i32_0 = arith.constant 0 : i32
    %2 = arith.cmpi ne, %1, %c0_i32_0 : i32
    scf.if %2 {
      %cst_19 = arith.constant 0.000000e+00 : f32
      %42 = vector.broadcast %cst_19 : f32 to vector<1x4x128xf32>
      %c0_20 = arith.constant 0 : index
      %c0_21 = arith.constant 0 : index
      %c0_22 = arith.constant 0 : index
      %43 = vector.load %arg4[%c0_20, %c0_21, %c0_22] : memref<1x4x128xf32, #tpu.memory_space<vmem>>, vector<1x4x128xf32>
      tpu.vector_store %arg4[%c0_20, %c0_21, %c0_22], %42 {strides = array<i32>} : memref<1x4x128xf32, #tpu.memory_space<vmem>>, vector<1x4x128xf32>,
    } else {
    }
    %c0 = arith.constant 0 : index
    %c0_1 = arith.constant 0 : index
    %3 = vector.load %arg2[%c0, %c0_1] : memref<16x128xf32, #tpu.memory_space<vmem>>, vector<16x128xf32>
    %c0_2 = arith.constant 0 : index
    %c0_3 = arith.constant 0 : index
    %4 = vector.load %arg3[%c0_2, %c0_3] : memref<16x128xf32, #tpu.memory_space<vmem>>, vector<16x128xf32>
    %cst = arith.constant 1.000000e+00 : f32
    %5 = vector.broadcast %cst : f32 to vector<16x128xf32>
    %6 = arith.subf %5, %4 : vector<16x128xf32>
    %7 = arith.mulf %3, %4 : vector<16x128xf32>
    %cst_4 = arith.constant 5.000000e-01 : f32
    %8 = vector.broadcast %cst_4 : f32 to vector<16x128xf32>
    %9 = arith.cmpf ogt, %7, %8 : vector<16x128xf32>
    %10 = arith.extui %9 : vector<16x128xi1> to vector<16x128xi32>
    %11 = arith.sitofp %10 : vector<16x128xi32> to vector<16x128xf32>
    %cst_5 = arith.constant 5.000000e-01 : f32
    %12 = vector.broadcast %cst_5 : f32 to vector<16x128xf32>
    %13 = arith.cmpf ogt, %4, %12 : vector<16x128xf32>
    %14 = arith.extui %13 : vector<16x128xi1> to vector<16x128xi32>
    %15 = arith.sitofp %14 : vector<16x128xi32> to vector<16x128xf32>
    %cst_6 = arith.constant 1.000000e+00 : f32
    %16 = vector.broadcast %cst_6 : f32 to vector<16x128xf32>
    %17 = arith.subf %16, %3 : vector<16x128xf32>
    %18 = arith.mulf %17, %6 : vector<16x128xf32>
    %cst_7 = arith.constant 5.000000e-01 : f32
    %19 = vector.broadcast %cst_7 : f32 to vector<16x128xf32>
    %20 = arith.cmpf ogt, %18, %19 : vector<16x128xf32>
    %21 = arith.extui %20 : vector<16x128xi1> to vector<16x128xi32>
    %22 = arith.sitofp %21 : vector<16x128xi32> to vector<16x128xf32>
    %cst_8 = arith.constant 5.000000e-01 : f32
    %23 = vector.broadcast %cst_8 : f32 to vector<16x128xf32>
    %24 = arith.cmpf ogt, %6, %23 : vector<16x128xf32>
    %25 = arith.extui %24 : vector<16x128xi1> to vector<16x128xi32>
    %26 = arith.sitofp %25 : vector<16x128xi32> to vector<16x128xf32>
    %cst_9 = arith.constant dense<0.000000e+00> : vector<128xf32>
    %27 = vector.multi_reduction <add>, %11, %cst_9 [0] : vector<16x128xf32> to vector<128xf32>
    %28 = vector.shape_cast %27 : vector<128xf32> to vector<1x128xf32>
    %cst_10 = arith.constant dense<0.000000e+00> : vector<128xf32>
    %29 = vector.multi_reduction <add>, %15, %cst_10 [0] : vector<16x128xf32> to vector<128xf32>
    %30 = vector.shape_cast %29 : vector<128xf32> to vector<1x128xf32>
    %cst_11 = arith.constant dense<0.000000e+00> : vector<128xf32>
    %31 = vector.multi_reduction <add>, %22, %cst_11 [0] : vector<16x128xf32> to vector<128xf32>
    %32 = vector.shape_cast %31 : vector<128xf32> to vector<1x128xf32>
    %cst_12 = arith.constant dense<0.000000e+00> : vector<128xf32>
    %33 = vector.multi_reduction <add>, %26, %cst_12 [0] : vector<16x128xf32> to vector<128xf32>
    %34 = vector.shape_cast %33 : vector<128xf32> to vector<1x128xf32>
    %35 = tpu.concatenate %28, %30, %32, %34 in 0 : vector<1x128xf32>, vector<1x128xf32>, vector<1x128xf32>, vector<1x128xf32> -> vector<4x128xf32>
    %c0_13 = arith.constant 0 : index
    %c0_14 = arith.constant 0 : index
    %c0_15 = arith.constant 0 : index
    %36 = vector.load %arg4[%c0_13, %c0_14, %c0_15] : memref<1x4x128xf32, #tpu.memory_space<vmem>>, vector<1x4x128xf32>
    %37 = vector.shape_cast %36 : vector<1x4x128xf32> to vector<4x128xf32>
    %38 = arith.addf %37, %35 : vector<4x128xf32>
    %c0_16 = arith.constant 0 : index
    %c0_17 = arith.constant 0 : index
    %c0_18 = arith.constant 0 : index
    %39 = vector.load %arg4[%c0_16, %c0_17, %c0_18] : memref<1x4x128xf32, #tpu.memory_space<vmem>>, vector<1x4x128xf32>
    %40 = vector.shape_cast %39 : vector<1x4x128xf32> to vector<4x128xf32>
    %41 = vector.shape_cast %38 : vector<4x128xf32> to vector<1x4x128xf32>
    tpu.vector_store %arg4[%c0_16, %c0_17, %c0_18], %41 {strides = array<i32>} : memref<1x4x128xf32, #tpu.memory_space<vmem>>, vector<1x4x128xf32>,
    return
  }
  func.func @transform_0(%arg0: i32, %arg1: i32) -> (i32, i32) {
    %c1_i32 = arith.constant 1 : i32
    %0 = arith.muli %arg0, %c1_i32 : i32
    %1 = arith.addi %0, %arg1 : i32
    %c0_i32 = arith.constant 0 : i32
    %c0_i32_0 = arith.constant 0 : i32
    return %1, %c0_i32 : i32, i32
  }
  func.func @transform_1(%arg0: i32, %arg1: i32) -> (i32, i32) {
    %c1_i32 = arith.constant 1 : i32
    %0 = arith.muli %arg0, %c1_i32 : i32
    %1 = arith.addi %0, %arg1 : i32
    %c0_i32 = arith.constant 0 : i32
    %c0_i32_0 = arith.constant 0 : i32
    return %1, %c0_i32 : i32, i32
  }
  func.func @transform_2(%arg0: i32, %arg1: i32) -> (i32, i32, i32) {
    %c0_i32 = arith.constant 0 : i32
    %c0_i32_0 = arith.constant 0 : i32
    %c0_i32_1 = arith.constant 0 : i32
    return %arg0, %c0_i32, %c0_i32_0 : i32, i32, i32
  }
}

</mosaic_0001>

<llo_original>
// kernel: _youdens_index_impl.1
$region0: #{_youdens_index_impl.1}
  #allocation0 [shape = 'u32[]', space=smem, size = 0x4, offset = 0x4, fixed_abs, tag = 'smem constant byte address 0x4 - core index']
  #allocation1 [shape = 'u32[144,128]{1,0:T(1,128)}', space=vmem, size = 0x12000, scoped, tag = 'internal scratch']
  %s0 = inlined_call_operand.vmem [shape: f32[16,128], index: 0, kind: input, shape index: {}]
  %s1 = inlined_call_operand.vmem [shape: f32[16,128], index: 1, kind: input, shape index: {}]
  %s2 = inlined_call_operand.vmem [shape: f32[1,4,128], index: 2, kind: output, shape index: {}]
  %s3 = sld [smem:[#allocation0]]
  $region22: #{_youdens_index_impl.1} parent=0
    _
  %s5 = ssub.s32 1, %s3
  %s6 = scalar_select 0, %s5, %s3
  // Predicated region
  $region2: #{_youdens_index_impl.1} parent=0 // pred_check
    _
  $region3: #{_youdens_index_impl.1} parent=0 // pred_check_branch
    %8 = sbr.rel (0) target = $region5
  $region4: #{_youdens_index_impl.1} parent=0 // pred_region
    %s9 = sadd.s32 0, 0
    %s10 = smul.u32 2, %s9
    %p11 = scmp.lt.s32.totalorder %s10, 1
    %s12 = scalar_select %p11, %s10, 1
    %s13 = smul.addr %s12, 8
    %s14 = scalar_lea.vmem %s0, %s13
    %s15 = sadd.s32 0, 0
    %s16 = smul.u32 2, %s15
  $region5: #{_youdens_index_impl.1} parent=0 // pred_fallthru
    _
  // Predicated region
  $region6: #{_youdens_index_impl.1} parent=0 // pred_check
    _
  $region7: #{_youdens_index_impl.1} parent=0 // pred_check_branch
    %18 = sbr.rel (0) target = $region9
  $region8: #{_youdens_index_impl.1} parent=0 // pred_region
    %s19 = sadd.s32 0, 0
    %s20 = smul.u32 2, %s19
    %p21 = scmp.lt.s32.totalorder %s20, 1
    %s22 = scalar_select %p21, %s20, 1
    %s23 = smul.addr %s22, 8
    %s24 = scalar_lea.vmem %s1, %s23
    %s25 = sadd.s32 0, 0
    %s26 = smul.u32 2, %s25
  $region9: #{_youdens_index_impl.1} parent=0 // pred_fallthru
    _
  %s27 = sadd.s32 0, 0
  %s28 = smul.u32 2, %s27
  %p29 = scmp.lt.s32.totalorder %s28, 1
  %s30 = scalar_select %p29, %s28, 1
  %s31 = smul.addr %s30, 8
  %s32 = scalar_lea.vmem %s0, %s31
  %s33 = sadd.s32 0, 0
  %s34 = smul.u32 2, %s33
  %p35 = scmp.lt.s32.totalorder %s34, 1
  %s36 = scalar_select %p35, %s34, 1
  %s37 = smul.addr %s36, 8
  %s38 = scalar_lea.vmem %s1, %s37
  %s39 = sadd.s32 0, 0
  %s40 = smul.u32 2, %s39
  %p41 = scmp.lt.s32.totalorder %s40, 1
  %s42 = scalar_select %p41, %s40, 1
  %s43 = smul.addr %s42, 8
  %s44 = scalar_lea.vmem %s0, %s43
  %s45 = sadd.s32 0, 0
  %s46 = smul.u32 2, %s45
  %s47 = sadd.s32 0, 0
  %s48 = smul.u32 2, %s47
  %p49 = scmp.lt.s32.totalorder %s48, 1
  %s50 = scalar_select %p49, %s48, 1
  %s51 = smul.addr %s50, 8
  %s52 = scalar_lea.vmem %s1, %s51
  %s53 = sadd.s32 0, 0
  %s54 = smul.u32 2, %s53
  %p55 = scmp.eq.s32.totalorder 0, 0
  // Predicated region
  $region10: #{_youdens_index_impl.1} parent=0 // pred_check
    %p56 = pneg %p55
  $region11: #{_youdens_index_impl.1} parent=0 // pred_check_branch
    %58 = sbr.rel (%p56) target = $region13
  $region12: #{_youdens_index_impl.1} parent=0 // pred_region
    %59 = vst [vmem:[%s2] sm:$0xf] 0.0
  $region13: #{_youdens_index_impl.1} parent=0 // pred_fallthru
    _
  %v60 = vld [vmem:[%s44] sm:$0xff]
  %v61 = vld [vmem:[%s44 + $0x8] sm:$0xff]
  %v62 = vld [vmem:[%s52] sm:$0xff]
  %v63 = vld [vmem:[%s52 + $0x8] sm:$0xff]
  %v64 = vsub.f32 1.0, %v62
  %v65 = vsub.f32 1.0, %v63
  %v66 = vmul.f32 %v60, %v62
  %v67 = vmul.f32 %v61, %v63
  %vm68 = vcmp.gt.f32.partialorder %v66, 0.5
  %vm69 = vcmp.gt.f32.partialorder %v67, 0.5
  %v70 = vsel %vm68, 1, 0
  %v71 = vsel %vm69, 1, 0
  %v72 = vcvt.s32.f32 %v70
  %v73 = vcvt.s32.f32 %v71
  %vm74 = vcmp.gt.f32.partialorder %v62, 0.5
  %vm75 = vcmp.gt.f32.partialorder %v63, 0.5
  %v76 = vsel %vm74, 1, 0
  %v77 = vsel %vm75, 1, 0
  %v78 = vcvt.s32.f32 %v76
  %v79 = vcvt.s32.f32 %v77
  %v80 = vsub.f32 1.0, %v60
  %v81 = vsub.f32 1.0, %v61
  %v82 = vmul.f32 %v80, %v64
  %v83 = vmul.f32 %v81, %v65
  %vm84 = vcmp.gt.f32.partialorder %v82, 0.5
  %vm85 = vcmp.gt.f32.partialorder %v83, 0.5
  %v86 = vsel %vm84, 1, 0
  %v87 = vsel %vm85, 1, 0
  %v88 = vcvt.s32.f32 %v86
  %v89 = vcvt.s32.f32 %v87
  %vm90 = vcmp.gt.f32.partialorder %v64, 0.5
  %vm91 = vcmp.gt.f32.partialorder %v65, 0.5
  %v92 = vsel %vm90, 1, 0
  %v93 = vsel %vm91, 1, 0
  %v94 = vcvt.s32.f32 %v92
  %v95 = vcvt.s32.f32 %v93
  %v96 = vadd.f32 %v72, %v73
  %v97 = vrot.slane %v96, 4
  %v98 = vadd.f32 %v96, %v97
  %v99 = vrot.slane %v98, 2
  %v100 = vadd.f32 %v98, %v99
  %v101 = vrot.slane %v100, 1
  %v102 = vadd.f32 %v100, %v101
  %v103 = vadd.f32 %v78, %v79
  %v104 = vrot.slane %v103, 4
  %v105 = vadd.f32 %v103, %v104
  %v106 = vrot.slane %v105, 2
  %v107 = vadd.f32 %v105, %v106
  %v108 = vrot.slane %v107, 1
  %v109 = vadd.f32 %v107, %v108
  %v110 = vadd.f32 %v88, %v89
  %v111 = vrot.slane %v110, 4
  %v112 = vadd.f32 %v110, %v111
  %v113 = vrot.slane %v112, 2
  %v114 = vadd.f32 %v112, %v113
  %v115 = vrot.slane %v114, 1
  %v116 = vadd.f32 %v114, %v115
  %v117 = vadd.f32 %v94, %v95
  %v118 = vrot.slane %v117, 4
  %v119 = vadd.f32 %v117, %v118
  %v120 = vrot.slane %v119, 2
  %v121 = vadd.f32 %v119, %v120
  %v122 = vrot.slane %v121, 1
  %v123 = vadd.f32 %v121, %v122
  %vm124 = vcmask 1040384
  %v125 = vsel %vm124, %v102, %v109
  %vm126 = vcmask 1041408
  %v127 = vsel %vm126, %v125, %v116
  %vm128 = vcmask 1042432
  %v129 = vsel %vm128, %v127, %v123
  %v130 = vld [vmem:[%s2] sm:$0xf]
  %v131 = vadd.f32 %v130, %v129
  %132 = vst [vmem:[%s2] sm:$0xf] %v131
  // Predicated region
  $region14: #{_youdens_index_impl.1} parent=0 // pred_check
    _
  $region15: #{_youdens_index_impl.1} parent=0 // pred_check_branch
    %134 = sbr.rel (0) target = $region17
  $region16: #{_youdens_index_impl.1} parent=0 // pred_region
    _
  $region17: #{_youdens_index_impl.1} parent=0 // pred_fallthru
    _
  // Predicated region
  $region18: #{_youdens_index_impl.1} parent=0 // pred_check
    _
  $region19: #{_youdens_index_impl.1} parent=0 // pred_check_branch
    %136 = sbr.rel (0) target = $region21
  $region20: #{_youdens_index_impl.1} parent=0 // pred_region
    _
  $region21: #{_youdens_index_impl.1} parent=0 // pred_fallthru
    _

</llo_original>
